<compile_context>
chip_gen: v5e
topology: v5e:2x2
jax: 0.10.0
libtpu: 0.0.40
codegen_flags: <defaults>
</compile_context>

<pallas_src>
import functools
import math

import jax
import jax.numpy as jnp
from jax.experimental import pallas as pl
from jax.experimental.pallas import tpu as pltpu


# -----------------------------------------------------------------------------
# Helpers
# -----------------------------------------------------------------------------
def _round_up(v, m):
    return -(-v // m) * m


def _cdiv(a, b):
    return -(-a // b)


def _pad_rows(rows, dtype):
    """Rows after sublane padding for the given dtype's native (8*packing,128) tile."""
    packing = max(1, 4 // jnp.dtype(dtype).itemsize)
    return _round_up(rows, 8 * packing)


def _vmem_input_budget_bytes():
    """Total budget for the double-buffered input streams, generation aware."""
    cap = 128 * 1024 * 1024
    try:
        cap = int(pltpu.get_tpu_info().vmem_capacity_bytes)
    except Exception:
        pass
    # <= 1/3 of physical VMEM (v7x: 64 MiB/TC), capped at 24 MiB (roofline knee
    # is already reached at ~1-2 MiB per buffer on v6e).
    return int(min(24 * 1024 * 1024, cap // 3))


# -----------------------------------------------------------------------------
# Kernel
# -----------------------------------------------------------------------------
def _srl_kernel(*refs, nonlin, has_mask, ts, s_total, tiles_per_split, needs_mask):
    """Accumulate per-batch-row inter=(x*y[*m]).sum and sum_gt=(y[*m]).sum.

    Grid = (split, batch_tile, spatial_tile); outputs are resident (TB, 128)
    f32 blocks indexed by (batch_tile, split) and accumulated across the
    innermost spatial axis.
    """
    if has_mask:
        x_ref, y_ref, m_ref, inter_ref, gt_ref = refs
    else:
        x_ref, y_ref, inter_ref, gt_ref = refs
        m_ref = None

    si = pl.program_id(2)

    @pl.when(si == 0)
    def _init():
        inter_ref[...] = jnp.zeros_like(inter_ref)
        gt_ref[...] = jnp.zeros_like(gt_ref)

    x = x_ref[...].astype(jnp.float32)
    if nonlin is not None:
        x = nonlin(x)  # elementwise nonlin fused in-kernel (EUP slot is free)
    ym = y_ref[...].astype(jnp.float32)
    if m_ref is not None:
        ym = ym * m_ref[...].astype(jnp.float32)

    def _accum(xv, ymv):
        inter_ref[:, 0:1] += jnp.sum(xv * ymv, axis=1, keepdims=True)
        gt_ref[:, 0:1] += jnp.sum(ymv, axis=1, keepdims=True)

    if not needs_mask:
        _accum(x, ym)
    else:
        # Global element offset of this (logical) spatial tile.  Tiles whose
        # logical range lies fully past S (split overrun) get a clamped input
        # block from the index_map but are entirely masked away here.
        base = (pl.program_id(0) * tiles_per_split + si) * ts
        is_interior = base + ts <= s_total

        @pl.when(is_interior)
        def _full():
            _accum(x, ym)

        @pl.when(jnp.logical_not(is_interior))
        def _tail():
            col = base + jax.lax.broadcasted_iota(jnp.int32, x.shape, 1)
            valid = col < s_total
            # Select (not multiply) so stale/garbage lanes (incl. NaN/Inf after
            # the nonlin) cannot leak into the sums.
            _accum(jnp.where(valid, x, 0.0), jnp.where(valid, ym, 0.0))


# -----------------------------------------------------------------------------
# Pallas launch
# -----------------------------------------------------------------------------
def _partial_sums(x2, y2, m2, apply_nonlin, max_ts=None):
    """Returns per-batch (inter_rec, sum_gt), both (B,) f32. No host-side padding."""
    B, S = x2.shape
    has_mask = m2 is not None
    streams = [x2, y2] + ([m2] if has_mask else [])

    # --- batch tile: native sublane tiling (32/16/8); full-dim fallback only
    # when B is not a multiple of 8, with padded-size-accurate VMEM accounting.
    if B % 8 == 0:
        TB = 32 if B % 32 == 0 else (16 if B % 16 == 0 else 8)
    else:
        # TODO(synk): for large B with B % 8 != 0, re-tile each row as
        # (rows, lanes) blocks instead of one full-batch tile.
        TB = B
    n_bt = B // TB

    # Bytes per lane-column for ONE buffer, summed over streams, including the
    # sublane padding of narrow (bf16 / int8) dtypes.
    per_col = sum(_pad_rows(TB, s.dtype) * jnp.dtype(s.dtype).itemsize
                  for s in streams)
    tb_pad_f32 = _pad_rows(TB, jnp.float32)

    budget = _vmem_input_budget_bytes()              # double-buffered inputs
    ts_budget = budget // (2 * per_col)
    ts_compute = (2 << 20) // (tb_pad_f32 * 4)       # ~2 MiB f32 working set/stream
    s128 = _round_up(S, 128)
    TS = max(128, (min(ts_budget, ts_compute, s128) // 128) * 128)
    if max_ts is not None:                           # test hook
        TS = max(128, min(TS, (max_ts // 128) * 128))

    n_s = _cdiv(S, TS)                               # real spatial tiles
    # Guarantee a >=2-extent parallel axis for v7x's two TensorCores even when
    # there is only a single batch tile.
    n_split = 2 if (n_bt < 2 and n_s >= 2) else 1
    tiles_per_split = _cdiv(n_s, n_split)
    needs_mask = (n_split * tiles_per_split * TS) != S

    grid = (n_split, n_bt, tiles_per_split)

    def in_map(p, bi, si):
        g = p * tiles_per_split + si
        # Clamp overrun tiles (from the ceil-split) to the last real tile; the
        # kernel masks their contribution to exactly zero.
        return (bi, jnp.minimum(g, n_s - 1))

    in_spec = pl.BlockSpec((TB, TS), in_map)
    out_spec = pl.BlockSpec((TB, 128), lambda p, bi, si: (bi, p))
    out_sds = jax.ShapeDtypeStruct((B, n_split * 128), jnp.float32)

    kernel = functools.partial(
        _srl_kernel, nonlin=apply_nonlin, has_mask=has_mask, ts=TS,
        s_total=S, tiles_per_split=tiles_per_split, needs_mask=needs_mask)

    # Accurate VMEM accounting: double-buffered inputs + double-buffered
    # outputs + in-kernel f32 temporaries, plus margin; floor at the default
    # scoped limit so tiny launches never under-provision Mosaic scratch.
    in_bytes = 2 * TS * per_col
    out_bytes = 2 * 2 * tb_pad_f32 * 128 * 4
    tmp_bytes = 4 * tb_pad_f32 * TS * 4
    vmem_limit = int(in_bytes + out_bytes + tmp_bytes + (2 << 20))
    vmem_limit = int(min(max(vmem_limit, 32 << 20), 56 << 20))

    elems = B * S
    cost = pl.CostEstimate(
        flops=(4 if has_mask else 3) * elems,
        transcendentals=elems if apply_nonlin is not None else 0,
        bytes_accessed=sum(int(s.size) * jnp.dtype(s.dtype).itemsize
                           for s in streams) + 2 * B * n_split * 128 * 4,
    )

    inter, gt = pl.pallas_call(
        kernel,
        out_shape=(out_sds, out_sds),
        grid=grid,
        in_specs=[in_spec] * len(streams),
        out_specs=(out_spec, out_spec),
        compiler_params=pltpu.CompilerParams(
            dimension_semantics=("parallel", "parallel", "arbitrary"),
            vmem_limit_bytes=vmem_limit,
        ),
        cost_estimate=cost,
    )(*streams)

    # Tiny epilogue: fold the 128 lanes and the split columns.
    return jnp.sum(inter, axis=1), jnp.sum(gt, axis=1)


def skeleton_recall_loss(x, y, loss_mask=None, *, apply_nonlin=None,
                         batch_dice=False, smooth=1.0, _max_ts=None):
    """JAX/Pallas equivalent of SkeletonRecallLoss(do_bg=False).forward(x, y, loss_mask).

    x: (B, H, W) predictions. Pre-activation if `apply_nonlin` is given; the
       nonlin must be elementwise (e.g. jax.nn.sigmoid) — it is fused per
       spatial tile inside the kernel. bf16 logits are recommended (the kernel
       casts to f32 and accumulates in f32), halving the dominant HBM stream.
    y / loss_mask: (B, H, W); bf16/int8 binary targets are exact and save
       bandwidth — the f32 cast happens inside the kernel.
    _max_ts: test hook to force a small spatial tile.
    """
    if x.shape != y.shape:
        y = jnp.reshape(y, x.shape)
    if loss_mask is not None and loss_mask.shape != x.shape:
        loss_mask = jnp.reshape(loss_mask, x.shape)

    B = x.shape[0]
    S = math.prod(x.shape[1:])
    x2 = jnp.reshape(x, (B, S))
    y2 = jnp.reshape(y, (B, S))
    m2 = None if loss_mask is None else jnp.reshape(loss_mask, (B, S))

    inter, sum_gt = _partial_sums(x2, y2, m2, apply_nonlin, max_ts=_max_ts)

    if batch_dice:
        # ddp AllGatherGrad(...).sum(0) on a single device is the identity, so
        # the ddp+batch_dice path collapses to a plain sum over batch.
        inter = jnp.sum(inter, keepdims=True)
        sum_gt = jnp.sum(sum_gt, keepdims=True)

    rec = (inter + smooth) / jnp.maximum(sum_gt + smooth, 1e-8)
    return -jnp.mean(rec)


# -----------------------------------------------------------------------------
# Pure-JAX reference (mirrors the PyTorch forward)
# -----------------------------------------------------------------------------
def _reference_loss(x, y, loss_mask=None, *, batch_dice=False, smooth=1.0):
    axes = (1, 2)
    if loss_mask is None:
        sum_gt = y.sum(axis=axes)
        inter = (x * y).sum(axis=axes)
    else:
        sum_gt = (y * loss_mask).sum(axis=axes)
        inter = (x * y * loss_mask).sum(axis=axes)
    if batch_dice:
        inter = inter.sum(0)
        sum_gt = sum_gt.sum(0)
    rec = (inter + smooth) / jnp.maximum(sum_gt + smooth, 1e-8)
    return -jnp.mean(rec)


if __name__ == "__main__":
    key = jax.random.PRNGKey(0)
    kx, ky, km, kx2, ky2 = jax.random.split(key, 5)

    B, H, W = 2, 16, 16
    # Pre-activation logits; sigmoid is fused inside the kernel.
    logits = jax.random.normal(kx, (B, H, W), dtype=jnp.float32)
    # Binary targets / mask in bf16 (exact for 0/1) to halve their HBM traffic.
    y = (jax.random.uniform(ky, (B, H, W)) > 0.7).astype(jnp.bfloat16)
    mask = (jax.random.uniform(km, (B, H, W)) > 0.2).astype(jnp.bfloat16)

    probs = jax.nn.sigmoid(logits)
    y_f32 = y.astype(jnp.float32)
    m_f32 = mask.astype(jnp.float32)

    # 1) unmasked path, fused nonlin
    loss = jax.block_until_ready(
        skeleton_recall_loss(logits, y, apply_nonlin=jax.nn.sigmoid))
    ref = _reference_loss(probs, y_f32)
    assert jnp.allclose(loss, ref, rtol=1e-5, atol=1e-6), (loss, ref)

    # 2) masked path + batch_dice (ddp all-gather is identity on 1 device)
    loss_bd = jax.block_until_ready(
        skeleton_recall_loss(logits, y, mask, apply_nonlin=jax.nn.sigmoid,
                             batch_dice=True))
    ref_bd = _reference_loss(probs, y_f32, m_f32, batch_dice=True)
    assert jnp.allclose(loss_bd, ref_bd, rtol=1e-5, atol=1e-6), (loss_bd, ref_bd)

    # 3) already-activated input, no nonlin, no mask, per-sample dice
    loss_pa = jax.block_until_ready(skeleton_recall_loss(probs, y))
    ref_pa = _reference_loss(probs, y_f32)
    assert jnp.allclose(loss_pa, ref_pa, rtol=1e-5, atol=1e-6), (loss_pa, ref_pa)

    # 4) ragged spatial size (S = 23*23 = 529, not a multiple of 128) with a
    #    forced tiny spatial tile so the in-kernel tail mask, the 2-way split
    #    ("parallel") axis, the clamped index_map and the fully-out-of-range
    #    overrun tiles are all exercised on-device.
    H2 = W2 = 23
    logits2 = jax.random.normal(kx2, (B, H2, W2), dtype=jnp.float32)
    y2 = (jax.random.uniform(ky2, (B, H2, W2)) > 0.6).astype(jnp.bfloat16)
    loss_rg = jax.block_until_ready(
        skeleton_recall_loss(logits2, y2, apply_nonlin=jax.nn.sigmoid,
                             _max_ts=128))
    ref_rg = _reference_loss(jax.nn.sigmoid(logits2), y2.astype(jnp.float32))
    assert jnp.allclose(loss_rg, ref_rg, rtol=1e-5, atol=1e-6), (loss_rg, ref_rg)

    print("KERNEL_OK")
</pallas_src>

<mosaic_0001>
module attributes {stable_mosaic.version = 11 : i64} {
  func.func @_srl_kernel(%arg0: i32, %arg1: i32, %arg2: i32, %arg3: memref<2x256xf32, #tpu.memory_space<vmem>>, %arg4: memref<2x256xbf16, #tpu.memory_space<vmem>>, %arg5: memref<2x128xf32, #tpu.memory_space<vmem>>, %arg6: memref<2x128xf32, #tpu.memory_space<vmem>>) attributes {dimension_semantics = [#tpu.dimension_semantics<parallel>, #tpu.dimension_semantics<parallel>, #tpu.dimension_semantics<arbitrary>], iteration_bounds = array<i64: 1, 1, 1>, scalar_prefetch = 0 : i64, scratch_operands = 0 : i64, tpu.core_type = #tpu.core_type<tc>, window_params = [{transform_indices = @transform_0, window_bounds = array<i64: 2, 256>}, {transform_indices = @transform_1, window_bounds = array<i64: 2, 256>}, {transform_indices = @transform_2, window_bounds = array<i64: 2, 128>}, {transform_indices = @transform_3, window_bounds = array<i64: 2, 128>}]} {
    %c0_i32 = arith.constant 0 : i32
    %0 = arith.cmpi eq, %arg2, %c0_i32 : i32
    %1 = arith.extui %0 : i1 to i32
    %c0_i32_0 = arith.constant 0 : i32
    %2 = arith.cmpi ne, %1, %c0_i32_0 : i32
    scf.if %2 {
      %cst_14 = arith.constant 0.000000e+00 : f32
      %22 = vector.broadcast %cst_14 : f32 to vector<2x128xf32>
      %c0_15 = arith.constant 0 : index
      %c0_16 = arith.constant 0 : index
      %23 = vector.load %arg5[%c0_15, %c0_16] : memref<2x128xf32, #tpu.memory_space<vmem>>, vector<2x128xf32>
      tpu.vector_store %arg5[%c0_15, %c0_16], %22 {strides = array<i32>} : memref<2x128xf32, #tpu.memory_space<vmem>>, vector<2x128xf32>,
      %cst_17 = arith.constant 0.000000e+00 : f32
      %24 = vector.broadcast %cst_17 : f32 to vector<2x128xf32>
      %c0_18 = arith.constant 0 : index
      %c0_19 = arith.constant 0 : index
      %25 = vector.load %arg6[%c0_18, %c0_19] : memref<2x128xf32, #tpu.memory_space<vmem>>, vector<2x128xf32>
      tpu.vector_store %arg6[%c0_18, %c0_19], %24 {strides = array<i32>} : memref<2x128xf32, #tpu.memory_space<vmem>>, vector<2x128xf32>,
    } else {
    }
    %c0 = arith.constant 0 : index
    %c0_1 = arith.constant 0 : index
    %3 = vector.load %arg3[%c0, %c0_1] : memref<2x256xf32, #tpu.memory_space<vmem>>, vector<2x256xf32>
    %4 = arith.negf %3 : vector<2x256xf32>
    %5 = math.exp %4 : vector<2x256xf32>
    %cst = arith.constant 1.000000e+00 : f32
    %6 = vector.broadcast %cst : f32 to vector<2x256xf32>
    %7 = arith.addf %6, %5 : vector<2x256xf32>
    %8 = arith.divf %6, %7 : vector<2x256xf32>
    %c0_2 = arith.constant 0 : index
    %c0_3 = arith.constant 0 : index
    %9 = vector.load %arg4[%c0_2, %c0_3] : memref<2x256xbf16, #tpu.memory_space<vmem>>, vector<2x256xbf16>
    %10 = arith.extf %9 : vector<2x256xbf16> to vector<2x256xf32>
    %c0_4 = arith.constant 0 : index
    %c0_5 = arith.constant 0 : index
    %11 = vector.load %arg5[%c0_4, %c0_5] : memref<2x128xf32, #tpu.memory_space<vmem>>, vector<2x1xf32>
    %12 = arith.mulf %8, %10 : vector<2x256xf32>
    %cst_6 = arith.constant dense<0.000000e+00> : vector<2xf32>
    %13 = vector.multi_reduction <add>, %12, %cst_6 [1] : vector<2x256xf32> to vector<2xf32>
    %14 = vector.shape_cast %13 : vector<2xf32> to vector<2x1xf32>
    %15 = arith.addf %11, %14 : vector<2x1xf32>
    %c0_7 = arith.constant 0 : index
    %c0_8 = arith.constant 0 : index
    %16 = vector.load %arg5[%c0_7, %c0_8] : memref<2x128xf32, #tpu.memory_space<vmem>>, vector<2x1xf32>
    tpu.vector_store %arg5[%c0_7, %c0_8], %15 {strides = array<i32>} : memref<2x128xf32, #tpu.memory_space<vmem>>, vector<2x1xf32>,
    %c0_9 = arith.constant 0 : index
    %c0_10 = arith.constant 0 : index
    %17 = vector.load %arg6[%c0_9, %c0_10] : memref<2x128xf32, #tpu.memory_space<vmem>>, vector<2x1xf32>
    %cst_11 = arith.constant dense<0.000000e+00> : vector<2xf32>
    %18 = vector.multi_reduction <add>, %10, %cst_11 [1] : vector<2x256xf32> to vector<2xf32>
    %19 = vector.shape_cast %18 : vector<2xf32> to vector<2x1xf32>
    %20 = arith.addf %17, %19 : vector<2x1xf32>
    %c0_12 = arith.constant 0 : index
    %c0_13 = arith.constant 0 : index
    %21 = vector.load %arg6[%c0_12, %c0_13] : memref<2x128xf32, #tpu.memory_space<vmem>>, vector<2x1xf32>
    tpu.vector_store %arg6[%c0_12, %c0_13], %20 {strides = array<i32>} : memref<2x128xf32, #tpu.memory_space<vmem>>, vector<2x1xf32>,
    return
  }
  func.func @transform_0(%arg0: i32, %arg1: i32, %arg2: i32) -> (i32, i32) {
    %c1_i32 = arith.constant 1 : i32
    %0 = arith.muli %arg0, %c1_i32 : i32
    %1 = arith.addi %0, %arg2 : i32
    %c0_i32 = arith.constant 0 : i32
    %2 = arith.minsi %1, %c0_i32 : i32
    %c0_i32_0 = arith.constant 0 : i32
    return %arg1, %2 : i32, i32
  }
  func.func @transform_1(%arg0: i32, %arg1: i32, %arg2: i32) -> (i32, i32) {
    %c1_i32 = arith.constant 1 : i32
    %0 = arith.muli %arg0, %c1_i32 : i32
    %1 = arith.addi %0, %arg2 : i32
    %c0_i32 = arith.constant 0 : i32
    %2 = arith.minsi %1, %c0_i32 : i32
    %c0_i32_0 = arith.constant 0 : i32
    return %arg1, %2 : i32, i32
  }
  func.func @transform_2(%arg0: i32, %arg1: i32, %arg2: i32) -> (i32, i32) {
    %c0_i32 = arith.constant 0 : i32
    return %arg1, %arg0 : i32, i32
  }
  func.func @transform_3(%arg0: i32, %arg1: i32, %arg2: i32) -> (i32, i32) {
    %c0_i32 = arith.constant 0 : i32
    return %arg1, %arg0 : i32, i32
  }
}

</mosaic_0001>

<llo_original>
// kernel: tpu_custom_call.1
$region0: #{tpu_custom_call.1}
  #allocation0 [shape = 'u32[]', space=smem, size = 0x4, offset = 0x4, fixed_abs, tag = 'smem constant byte address 0x4 - core index']
  #allocation1 [shape = 'u32[72,128]{1,0:T(1,128)}', space=vmem, size = 0x9000, scoped, tag = 'internal scratch']
  %s0 = inlined_call_operand.hbm [shape: f32[2,256], index: 0, kind: input, shape index: {}]
  %s1 = inlined_call_operand.hbm [shape: bf16[2,256], index: 1, kind: input, shape index: {}]
  %s2 = inlined_call_operand.hbm [shape: f32[2,128], index: 2, kind: output, shape index: {0}]
  %s3 = inlined_call_operand.hbm [shape: f32[2,128], index: 3, kind: output, shape index: {1}]
  %4 = xla_tuple %s2, %s3
  %s5 = sld [smem:[#allocation0]]
  $region38: #{tpu_custom_call.1} parent=0
    _
  %s7 = ssub.s32 1, %s5
  %s8 = scalar_select 0, %s7, %s5
  $region1: #{tpu_custom_call.1} parent=0
    #allocation2 [shape = 'u8[2048]{0}', space=vmem, size = 0x800, scoped, tag = 'input window, operand 0, single buffered']
    #allocation3 [shape = 's32[1]{0}', space=sflag, size = 0x4, scoped, tag = 'scoped memory for tpu_custom_call.1']
    #allocation4 [shape = 's32[1]{0}', space=sflag, size = 0x4, scoped, tag = 'scoped memory for tpu_custom_call.1']
    #allocation5 [shape = 'u8[1024]{0}', space=vmem, size = 0x400, scoped, tag = 'input window, operand 1, single buffered']
    #allocation6 [shape = 's32[1]{0}', space=sflag, size = 0x4, scoped, tag = 'scoped memory for tpu_custom_call.1']
    #allocation7 [shape = 'u8[1024]{0}', space=vmem, size = 0x400, scoped, tag = 'output window, operand 0, single buffered']
    #allocation8 [shape = 'u8[1024]{0}', space=vmem, size = 0x400, scoped, tag = 'output window, operand 1, single buffered']
    #allocation9 [shape = 's32[1]{0}', space=sflag, size = 0x4, scoped, tag = 'scoped memory for tpu_custom_call.1']
    %9 = vsyncpa [#allocation3], 0
    %10 = vsyncpa [#allocation6], 0
    %11 = vsyncpa [#allocation4], 0
    %12 = vsyncpa [#allocation9], 0
    // Predicated region
    $region2: #{tpu_custom_call.1} parent=1 // pred_check
      _
    $region3: #{tpu_custom_call.1} parent=1 // pred_check_branch
      %14 = sbr.rel (0) target = $region5
    $region4: #{tpu_custom_call.1} parent=1 // pred_region
      %s15 = sadd.s32 0, 0
      %p16 = scmp.lt.s32.totalorder %s15, 0
      %s17 = scalar_select %p16, %s15, 0
      %s18 = smul.u32 2, %s17
      %20 = vsyncadd [#allocation3], 0
      %s21 = smul.addr %s18, 2
      %s22 = scalar_lea.hbm %s0, %s21
      %s24 = sshll.u32 %s22, 4
      %s25 = int_to_ptr.hbm [resolvable:$true] %s24
      %s26 = sshll.u32 [#allocation2], 4
      %s27 = int_to_ptr.vmem [resolvable:$true] %s26
      %29 = dma.hbm_to_vmem [thread:$0]  %s25, 64, %s27, [#allocation3]
    $region5: #{tpu_custom_call.1} parent=1 // pred_fallthru
      _
    // Predicated region
    $region6: #{tpu_custom_call.1} parent=1 // pred_check
      _
    $region7: #{tpu_custom_call.1} parent=1 // pred_check_branch
      %31 = sbr.rel (0) target = $region9
    $region8: #{tpu_custom_call.1} parent=1 // pred_region
      %s32 = sadd.s32 0, 0
      %p33 = scmp.lt.s32.totalorder %s32, 0
      %s34 = scalar_select %p33, %s32, 0
      %s35 = smul.u32 2, %s34
      %37 = vsyncadd [#allocation6], 0
      %s38 = scalar_lea.hbm %s1, %s35
      %s40 = sshll.u32 %s38, 4
      %s41 = int_to_ptr.hbm [resolvable:$true] %s40
      %s42 = sshll.u32 [#allocation5], 4
      %s43 = int_to_ptr.vmem [resolvable:$true] %s42
      %45 = dma.hbm_to_vmem [thread:$0]  %s41, 32, %s43, [#allocation6]
    $region9: #{tpu_custom_call.1} parent=1 // pred_fallthru
      _
    // Predicated region
    $region10: #{tpu_custom_call.1} parent=1 // pred_check
      _
    $region11: #{tpu_custom_call.1} parent=1 // pred_check_branch
      %47 = sbr.rel (0) target = $region13
    $region12: #{tpu_custom_call.1} parent=1 // pred_region
      %49 = dma.done [#allocation3], 64
    $region13: #{tpu_custom_call.1} parent=1 // pred_fallthru
      _
    // Predicated region
    $region14: #{tpu_custom_call.1} parent=1 // pred_check
      _
    $region15: #{tpu_custom_call.1} parent=1 // pred_check_branch
      %51 = sbr.rel (0) target = $region17
    $region16: #{tpu_custom_call.1} parent=1 // pred_region
      %53 = dma.done [#allocation6], 32
    $region17: #{tpu_custom_call.1} parent=1 // pred_fallthru
      _
    %s54 = sadd.s32 0, 0
    %p55 = scmp.lt.s32.totalorder %s54, 0
    %s56 = scalar_select %p55, %s54, 0
    %s57 = smul.u32 2, %s56
    %s58 = sadd.s32 0, 0
    %p59 = scmp.lt.s32.totalorder %s58, 0
    %s60 = scalar_select %p59, %s58, 0
    %s61 = smul.u32 2, %s60
    %p62 = scmp.eq.s32.totalorder 0, 0
    // Predicated region
    $region18: #{tpu_custom_call.1} parent=1 // pred_check
      %p63 = pneg %p62
    $region19: #{tpu_custom_call.1} parent=1 // pred_check_branch
      %65 = sbr.rel (%p63) target = $region21
    $region20: #{tpu_custom_call.1} parent=1 // pred_region
      %66 = vst [vmem:[#allocation7] sm:$0x3] 0.0
      %67 = vst [vmem:[#allocation8] sm:$0x3] 0.0
    $region21: #{tpu_custom_call.1} parent=1 // pred_fallthru
      _
    %v68 = vld [vmem:[#allocation2] sm:$0xf]
    %v69 = vxor.u32 %v68, 2147483648
    %v70 = vmul.f32 %v69, 1.442695
    %v71 = vpow.pop %v70
    %v72 = vadd.f32 %v71, 1.0
    %v73 = vrcp.pop %v72
    %v74 = vmul.f32 %v72, %v73
    %v75 = vsub.f32 1.0, %v74
    %v76 = vmul.f32 %v73, %v75
    %v77 = vadd.f32 %v73, %v76
    %vm78 = vweird.f32 %v72
    %vm79 = vweird.f32 %v73
    %vm80 = vmor %vm78, %vm79
    %v81 = vsel %vm80, %v73, %v77
    %v82 = vand.u32 2147483647, %v72
    %vm83 = vcmp.eq.f32.partialorder %v82, 8.507059e+37
    %v84 = vand.u32 %v72, 2147483648
    %v85 = vor.u32 1.1754944e-38, %v84
    %v86 = vsel %vm83, %v85, %v81
    %v87 = vmul.f32 1.0, %v86
    %v88 = vld [vmem:[#allocation5] sm:$0x3]
    %v89 = vunpack.c.l.bf16 %v88
    %v90 = vld [vmem:[#allocation7] sm:$0x3]
    %v91 = vmul.f32 %v87, %v89
    %93 = vst [vmem:[#allocation1] ss:$4 sm:$0xff] %v91
    %v94 = vld.sshfl [vmem:[#allocation1] sm:$0xff pattern:$0x73625140]
    %v95 = vld.sshfl [vmem:[#allocation1 + $0x8] sm:$0xff pattern:$0x73625140]
    %vm98 = vcmask 1041408
    %v99 = vsel %vm98, %v94, 0.0
    %v100 = vsel %vm98, %v95, 0.0
    %v101 = vadd.f32 %v99, %v100
    %102 = vadd.xlane.f32.xlu0 %v101
    %v103 = vpop.xlane.xlu0 %102
    %v104 = vadd.f32 %v90, %v103
    %vm105 = vcmask 1024
    %106 = vst.msk [vmem:[#allocation7] sm:$0x3] %vm105, %v104
    %v107 = vld [vmem:[#allocation8] sm:$0x3]
    %109 = vst [vmem:[#allocation1] ss:$4 sm:$0xff] %v89
    %v110 = vld.sshfl [vmem:[#allocation1] sm:$0xff pattern:$0x73625140]
    %v111 = vld.sshfl [vmem:[#allocation1 + $0x8] sm:$0xff pattern:$0x73625140]
    %v114 = vsel %vm98, %v110, 0.0
    %v115 = vsel %vm98, %v111, 0.0
    %v116 = vadd.f32 %v114, %v115
    %117 = vadd.xlane.f32.xlu0 %v116
    %v118 = vpop.xlane.xlu0 %117
    %v119 = vadd.f32 %v107, %v118
    %120 = vst.msk [vmem:[#allocation8] sm:$0x3] %vm105, %v119
    // Predicated region
    $region22: #{tpu_custom_call.1} parent=1 // pred_check
      _
    $region23: #{tpu_custom_call.1} parent=1 // pred_check_branch
      %122 = sbr.rel (0) target = $region25
    $region24: #{tpu_custom_call.1} parent=1 // pred_region
      %124 = vsyncadd [#allocation4], 0
      %s126 = sshll.u32 [#allocation7], 4
      %s127 = int_to_ptr.vmem [resolvable:$true] %s126
      %s128 = sshll.u32 %s2, 4
      %s129 = int_to_ptr.hbm [resolvable:$true] %s128
      %131 = dma.vmem_to_hbm [thread:$0]  %s127, 32, %s129, [#allocation4]
    $region25: #{tpu_custom_call.1} parent=1 // pred_fallthru
      _
    // Predicated region
    $region26: #{tpu_custom_call.1} parent=1 // pred_check
      _
    $region27: #{tpu_custom_call.1} parent=1 // pred_check_branch
      %133 = sbr.rel (0) target = $region29
    $region28: #{tpu_custom_call.1} parent=1 // pred_region
      %135 = vsyncadd [#allocation9], 0
      %s137 = sshll.u32 [#allocation8], 4
      %s138 = int_to_ptr.vmem [resolvable:$true] %s137
      %s139 = sshll.u32 %s3, 4
      %s140 = int_to_ptr.hbm [resolvable:$true] %s139
      %142 = dma.vmem_to_hbm [thread:$0]  %s138, 32, %s140, [#allocation9]
    $region29: #{tpu_custom_call.1} parent=1 // pred_fallthru
      _
    // Predicated region
    $region30: #{tpu_custom_call.1} parent=1 // pred_check
      _
    $region31: #{tpu_custom_call.1} parent=1 // pred_check_branch
      %144 = sbr.rel (0) target = $region33
    $region32: #{tpu_custom_call.1} parent=1 // pred_region
      %146 = dma.done [#allocation4], 32
    $region33: #{tpu_custom_call.1} parent=1 // pred_fallthru
      _
    // Predicated region
    $region34: #{tpu_custom_call.1} parent=1 // pred_check
      _
    $region35: #{tpu_custom_call.1} parent=1 // pred_check_branch
      %148 = sbr.rel (0) target = $region37
    $region36: #{tpu_custom_call.1} parent=1 // pred_region
      %150 = dma.done [#allocation9], 32
    $region37: #{tpu_custom_call.1} parent=1 // pred_fallthru
      _
    %151 = vsyncpa [#allocation3], 1
    %152 = vsyncpa [#allocation6], 1
    %153 = vsyncpa [#allocation4], 1
    %154 = vsyncpa [#allocation9], 1

</llo_original>
